<compile_context>
chip_gen: v7x
topology: tpu7x:2x2x1
jax: 0.10.0
libtpu: 0.0.40
codegen_flags: <defaults>
</compile_context>

<pallas_src>
import functools

import jax
import jax.numpy as jnp
from jax.experimental import pallas as pl
from jax.experimental.pallas import tpu as pltpu

LN_EPS = 1e-5  # torch.nn.LayerNorm default


def _ffn_kernel(x_ref, w1_ref, w2_ref, g_ref, b_ref, o_ref, acc_ref):
    k = pl.program_id(1)

    @pl.when(k == 0)
    def _():
        acc_ref[...] = jnp.zeros_like(acc_ref)

    # First matmul chunk: (tm, D) @ (D, tf) -> (tm, tf), f32 accumulation on the MXU.
    h = jnp.dot(x_ref[...], w1_ref[...], preferred_element_type=jnp.float32)
    # ReLU is elementwise over d_ff, so chunking d_ff is exact.
    h = jnp.maximum(h, 0.0).astype(w2_ref.dtype)
    # Second matmul chunk: (tm, tf) @ (tf, D), accumulated over d_ff chunks in f32.
    acc_ref[...] += jnp.dot(h, w2_ref[...], preferred_element_type=jnp.float32)

    @pl.when(k == pl.num_programs(1) - 1)
    def _():
        # residual + LayerNorm over the last dim (biased variance, eps=1e-5), f32 math.
        z = x_ref[...].astype(jnp.float32) + acc_ref[...]
        mean = jnp.mean(z, axis=-1, keepdims=True)
        var = jnp.mean((z - mean) * (z - mean), axis=-1, keepdims=True)
        zn = (z - mean) * jax.lax.rsqrt(var + LN_EPS)
        o_ref[...] = (zn * g_ref[...].astype(jnp.float32)
                      + b_ref[...].astype(jnp.float32)).astype(o_ref.dtype)


def _round_up(n, m):
    return (n + m - 1) // m * m


def _vmem_capacity_bytes():
    """Physical VMEM of this generation (128 MiB v5e/v6e, 64 MiB v7x)."""
    try:
        cap = int(pltpu.get_tpu_info().vmem_capacity_bytes)
        if cap > 0:
            return cap
    except Exception:
        pass
    return 64 * 1024 * 1024  # conservative (v7x-sized) fallback


def _vmem_estimate(tm, tf, D, in_bpe, w_bpe, out_bpe):
    """Footprint of one grid step, incl. double buffers, acc and the h intermediate."""
    est = 2 * tm * D * in_bpe          # x row tile (double-buffered)
    est += 2 * tm * D * out_bpe        # output row tile (double-buffered)
    est += 2 * D * tf * w_bpe          # w1 chunk (double-buffered)
    est += 2 * tf * D * w_bpe          # w2 chunk (double-buffered)
    est += 2 * 2 * D * 4               # gamma / beta
    est += tm * D * 4                  # f32 accumulator scratch
    est += tm * tf * (4 + w_bpe)       # intermediate h: f32 matmul result + cast copy
    return est


def feed_forward(x, w1, w2, gamma, beta, *, tm=None, tf=None,
                 compute_dtype=jnp.bfloat16):
    """x: (B, S, d_model); w1: (d_model, d_ff); w2: (d_ff, d_model);
    gamma, beta: (d_model,). Returns LayerNorm(x + ReLU(x @ w1) @ w2) in x.dtype.

    Matmul operands are cast to `compute_dtype` (default bf16) in the wrapper;
    accumulation and the LayerNorm epilogue are f32.
    """
    B, S, D = x.shape
    F = w1.shape[1]
    assert w1.shape == (D, F) and w2.shape == (F, D)
    assert gamma.shape == (D,) and beta.shape == (D,)
    rows = B * S

    out_dtype = x.dtype
    cdt = jnp.dtype(compute_dtype) if compute_dtype is not None else jnp.dtype(x.dtype)
    in_bpe = w_bpe = cdt.itemsize
    out_bpe = jnp.dtype(out_dtype).itemsize

    vmem_cap = _vmem_capacity_bytes()
    budget = max(vmem_cap - (16 << 20), 24 << 20)      # leave headroom below physical
    small_vmem = vmem_cap <= (80 << 20)                # v7x-class (64 MiB)
    sub = 16 if in_bpe == 2 else (32 if in_bpe == 1 else 8)   # sublane tile per dtype

    # ---- row tile: push well above the weight-streaming roofline knee ----
    if tm is None:
        tm = 512 if small_vmem else 1024
    tm = max(sub, min(_round_up(tm, sub), _round_up(rows, sub)))

    # ---- d_ff tile ----
    if tf is None:
        # Weight-resident fast path: if both full weights (double-buffered) fit the
        # budget, use tf = F so Pallas fetches them from HBM exactly once (block
        # index is constant across the whole grid) and reuses them for all row tiles.
        if _vmem_estimate(tm, F, D, in_bpe, w_bpe, out_bpe) <= budget:
            tf = F
        else:
            tf_target = 512 if small_vmem else 1024
            tf = 0
            # Prefer multiples of 256 (fills the 2x256^2 MXU on v6e/v7x; also fine on
            # v5e's 4x128^2) that divide F -> no weight padding on the hot path.
            for mult in (256, 128):
                t = (min(tf_target, F) // mult) * mult
                while t >= mult:
                    if F % t == 0:
                        tf = t
                        break
                    t -= mult
                if tf:
                    break
            if tf == 0:
                # TODO(synk): d_ff not a multiple of 128 -> fall back to padding the
                # weights (extra HBM copy per call); pad once outside if this is hot.
                tf = min(_round_up(tf_target, 128), _round_up(F, 128))
    else:
        tf = min(tf, F)
        tf = F if tf >= F else max(128, _round_up(tf, 128))

    # Shrink tm until the full per-step footprint (incl. h) fits the VMEM budget.
    while _vmem_estimate(tm, tf, D, in_bpe, w_bpe, out_bpe) > budget and tm > sub:
        tm = max(sub, (tm // 2 // sub) * sub)

    f_pad = F if tf >= F else _round_up(F, tf)
    rows_pad = _round_up(rows, tm)

    x2 = x.reshape(rows, D).astype(cdt)
    if rows_pad != rows:
        x2 = jnp.pad(x2, ((0, rows_pad - rows), (0, 0)))
    w1p = w1.astype(cdt)
    w2p = w2.astype(cdt)
    if f_pad != F:
        # Zero-padded d_ff is exact: ReLU(0) = 0 contributes nothing to the 2nd matmul.
        w1p = jnp.pad(w1p, ((0, 0), (0, f_pad - F)))
        w2p = jnp.pad(w2p, ((0, f_pad - F), (0, 0)))
    g2 = gamma.reshape(1, D)
    b2 = beta.reshape(1, D)

    grid = (rows_pad // tm, f_pad // tf)

    est = _vmem_estimate(tm, tf, D, in_bpe, w_bpe, out_bpe)
    # Never declare more than the physical capacity (v7x is only 64 MiB).
    vmem_limit = min(vmem_cap - (8 << 20), max(32 << 20, int(est * 1.5)))

    out = pl.pallas_call(
        _ffn_kernel,
        out_shape=jax.ShapeDtypeStruct((rows_pad, D), out_dtype),
        grid_spec=pltpu.PrefetchScalarGridSpec(
            num_scalar_prefetch=0,
            grid=grid,
            in_specs=[
                pl.BlockSpec((tm, D), lambda i, k: (i, 0)),   # x row tile
                pl.BlockSpec((D, tf), lambda i, k: (0, k)),   # w1 chunk (d_ff stream)
                pl.BlockSpec((tf, D), lambda i, k: (k, 0)),   # w2 chunk (d_ff stream)
                pl.BlockSpec((1, D), lambda i, k: (0, 0)),    # LN gamma
                pl.BlockSpec((1, D), lambda i, k: (0, 0)),    # LN beta
            ],
            out_specs=pl.BlockSpec((tm, D), lambda i, k: (i, 0)),
            scratch_shapes=[pltpu.VMEM((tm, D), jnp.float32)],
        ),
        compiler_params=pltpu.CompilerParams(
            dimension_semantics=("parallel", "arbitrary"),
            vmem_limit_bytes=vmem_limit),
    )(x2, w1p, w2p, g2, b2)

    if rows_pad != rows:
        out = out[:rows]
    return out.reshape(B, S, D)


def _reference(x, w1, w2, gamma, beta):
    h = jnp.maximum(x @ w1, 0.0)
    y = h @ w2
    z = x + y
    mean = jnp.mean(z, axis=-1, keepdims=True)
    var = jnp.mean((z - mean) ** 2, axis=-1, keepdims=True)
    return (z - mean) / jnp.sqrt(var + LN_EPS) * gamma + beta


if __name__ == "__main__":
    # Small but lane-aligned shapes (d_model multiple of 128 keeps stores unmasked).
    d_model, d_ff = 128, 512
    B, S = 2, 100   # rows = 200 -> exercises row padding to the tile multiple

    key = jax.random.PRNGKey(0)
    kx, k1, k2 = jax.random.split(key, 3)

    x = jax.random.normal(kx, (B, S, d_model), dtype=jnp.float32)
    # Linear weights (bias=False), scale ~ 1/sqrt(fan_in)
    w1 = jax.random.normal(k1, (d_model, d_ff), dtype=jnp.float32) / jnp.sqrt(d_model)
    w2 = jax.random.normal(k2, (d_ff, d_model), dtype=jnp.float32) / jnp.sqrt(d_ff)
    # LayerNorm default init: weight=1, bias=0
    gamma = jnp.ones((d_model,), dtype=jnp.float32)
    beta = jnp.zeros((d_model,), dtype=jnp.float32)

    # Reference on the same bf16-quantized operands (kernel computes bf16 matmuls
    # with f32 accumulation; only rounding-order differences remain).
    xq = x.astype(jnp.bfloat16).astype(jnp.float32)
    w1q = w1.astype(jnp.bfloat16).astype(jnp.float32)
    w2q = w2.astype(jnp.bfloat16).astype(jnp.float32)
    ref = _reference(xq, w1q, w2q, gamma, beta)

    # 1) Forced small tiles: exercises multiple row tiles, multiple d_ff chunks
    #    (accumulator init/finalize via pl.when) and the row-padding path.
    out_a = jax.block_until_ready(feed_forward(x, w1, w2, gamma, beta, tm=128, tf=256))
    assert out_a.shape == (B, S, d_model)
    assert jnp.allclose(out_a, ref, atol=2e-2, rtol=2e-2), "mismatch vs reference (forced tiles)"

    # 2) Auto tiling: exercises the generation-aware / weight-resident fast path.
    out_b = jax.block_until_ready(feed_forward(x, w1, w2, gamma, beta))
    assert out_b.shape == (B, S, d_model)
    assert jnp.allclose(out_b, ref, atol=2e-2, rtol=2e-2), "mismatch vs reference (auto tiles)"

    print("KERNEL_OK")
</pallas_src>

<mosaic_0001>
module attributes {stable_mosaic.version = 11 : i64} {
  func.func @_ffn_kernel(%arg0: i32, %arg1: i32, %arg2: memref<128x128xbf16, #tpu.memory_space<vmem>>, %arg3: memref<128x256xbf16, #tpu.memory_space<vmem>>, %arg4: memref<256x128xbf16, #tpu.memory_space<vmem>>, %arg5: memref<1x128xf32, #tpu.memory_space<vmem>>, %arg6: memref<1x128xf32, #tpu.memory_space<vmem>>, %arg7: memref<128x128xf32, #tpu.memory_space<vmem>>, %arg8: memref<128x128xf32, #tpu.memory_space<vmem>>) attributes {dimension_semantics = [#tpu.dimension_semantics<parallel>, #tpu.dimension_semantics<arbitrary>], iteration_bounds = array<i64: 2, 2>, scalar_prefetch = 0 : i64, scratch_operands = 1 : i64, tpu.core_type = #tpu.core_type<tc>, window_params = [{transform_indices = @transform_0, window_bounds = array<i64: 128, 128>}, {transform_indices = @transform_1, window_bounds = array<i64: 128, 256>}, {transform_indices = @transform_2, window_bounds = array<i64: 256, 128>}, {pipeline_mode = #tpu.pipeline_mode<synchronous>, transform_indices = @transform_3, window_bounds = array<i64: 1, 128>}, {pipeline_mode = #tpu.pipeline_mode<synchronous>, transform_indices = @transform_4, window_bounds = array<i64: 1, 128>}, {transform_indices = @transform_5, window_bounds = array<i64: 128, 128>}]} {
    %c0_i32 = arith.constant 0 : i32
    %0 = arith.cmpi eq, %arg1, %c0_i32 : i32
    %1 = arith.extui %0 : i1 to i32
    %c0_i32_0 = arith.constant 0 : i32
    %2 = arith.cmpi ne, %1, %c0_i32_0 : i32
    scf.if %2 {
      %cst_13 = arith.constant 0.000000e+00 : f32
      %17 = vector.broadcast %cst_13 : f32 to vector<128x128xf32>
      %c0_14 = arith.constant 0 : index
      %c0_15 = arith.constant 0 : index
      %18 = vector.load %arg8[%c0_14, %c0_15] : memref<128x128xf32, #tpu.memory_space<vmem>>, vector<128x128xf32>
      tpu.vector_store %arg8[%c0_14, %c0_15], %17 {strides = array<i32>} : memref<128x128xf32, #tpu.memory_space<vmem>>, vector<128x128xf32>,
    } else {
    }
    %c0 = arith.constant 0 : index
    %c0_1 = arith.constant 0 : index
    %3 = vector.load %arg2[%c0, %c0_1] : memref<128x128xbf16, #tpu.memory_space<vmem>>, vector<128x128xbf16>
    %c0_2 = arith.constant 0 : index
    %c0_3 = arith.constant 0 : index
    %4 = vector.load %arg3[%c0_2, %c0_3] : memref<128x256xbf16, #tpu.memory_space<vmem>>, vector<128x256xbf16>
    %cst = arith.constant dense<0.000000e+00> : vector<128x256xf32>
    %5 = tpu.matmul %3, %4, %cst {dimension_numbers = #tpu.dot_dimension_numbers<[1], [0], [0], [1], [0, 0, 1, 1], [], []>} : vector<128x128xbf16>, vector<128x256xbf16>, vector<128x256xf32> -> vector<128x256xf32>
    %cst_4 = arith.constant 0.000000e+00 : f32
    %6 = vector.broadcast %cst_4 : f32 to vector<128x256xf32>
    %7 = arith.maximumf %5, %6 : vector<128x256xf32>
    %8 = arith.truncf %7 : vector<128x256xf32> to vector<128x256xbf16>
    %c0_5 = arith.constant 0 : index
    %c0_6 = arith.constant 0 : index
    %9 = vector.load %arg8[%c0_5, %c0_6] : memref<128x128xf32, #tpu.memory_space<vmem>>, vector<128x128xf32>
    %c0_7 = arith.constant 0 : index
    %c0_8 = arith.constant 0 : index
    %10 = vector.load %arg4[%c0_7, %c0_8] : memref<256x128xbf16, #tpu.memory_space<vmem>>, vector<256x128xbf16>
    %cst_9 = arith.constant dense<0.000000e+00> : vector<128x128xf32>
    %11 = tpu.matmul %8, %10, %cst_9 {dimension_numbers = #tpu.dot_dimension_numbers<[1], [0], [0], [1], [0, 0, 1, 1], [], []>} : vector<128x256xbf16>, vector<256x128xbf16>, vector<128x128xf32> -> vector<128x128xf32>
    %12 = arith.addf %9, %11 : vector<128x128xf32>
    %c0_10 = arith.constant 0 : index
    %c0_11 = arith.constant 0 : index
    %13 = vector.load %arg8[%c0_10, %c0_11] : memref<128x128xf32, #tpu.memory_space<vmem>>, vector<128x128xf32>
    tpu.vector_store %arg8[%c0_10, %c0_11], %12 {strides = array<i32>} : memref<128x128xf32, #tpu.memory_space<vmem>>, vector<128x128xf32>,
    %c1_i32 = arith.constant 1 : i32
    %14 = arith.cmpi eq, %arg1, %c1_i32 : i32
    %15 = arith.extui %14 : i1 to i32
    %c0_i32_12 = arith.constant 0 : i32
    %16 = arith.cmpi ne, %15, %c0_i32_12 : i32
    scf.if %16 {
      %c0_13 = arith.constant 0 : index
      %c0_14 = arith.constant 0 : index
      %17 = vector.load %arg2[%c0_13, %c0_14] : memref<128x128xbf16, #tpu.memory_space<vmem>>, vector<128x128xbf16>
      %18 = arith.extf %17 : vector<128x128xbf16> to vector<128x128xf32>
      %c0_15 = arith.constant 0 : index
      %c0_16 = arith.constant 0 : index
      %19 = vector.load %arg8[%c0_15, %c0_16] : memref<128x128xf32, #tpu.memory_space<vmem>>, vector<128x128xf32>
      %20 = arith.addf %18, %19 : vector<128x128xf32>
      %cst_17 = arith.constant dense<0.000000e+00> : vector<128xf32>
      %21 = vector.multi_reduction <add>, %20, %cst_17 [1] : vector<128x128xf32> to vector<128xf32>
      %22 = vector.shape_cast %21 : vector<128xf32> to vector<128x1xf32>
      %cst_18 = arith.constant 1.280000e+02 : f32
      %23 = vector.broadcast %cst_18 : f32 to vector<128x1xf32>
      %24 = arith.divf %22, %23 : vector<128x1xf32>
      %25 = vector.broadcast %24 : vector<128x1xf32> to vector<128x128xf32>
      %26 = arith.subf %20, %25 : vector<128x128xf32>
      %27 = vector.broadcast %24 : vector<128x1xf32> to vector<128x128xf32>
      %28 = arith.subf %20, %27 : vector<128x128xf32>
      %29 = arith.mulf %26, %28 : vector<128x128xf32>
      %cst_19 = arith.constant dense<0.000000e+00> : vector<128xf32>
      %30 = vector.multi_reduction <add>, %29, %cst_19 [1] : vector<128x128xf32> to vector<128xf32>
      %31 = vector.shape_cast %30 : vector<128xf32> to vector<128x1xf32>
      %cst_20 = arith.constant 1.280000e+02 : f32
      %32 = vector.broadcast %cst_20 : f32 to vector<128x1xf32>
      %33 = arith.divf %31, %32 : vector<128x1xf32>
      %34 = vector.broadcast %24 : vector<128x1xf32> to vector<128x128xf32>
      %35 = arith.subf %20, %34 : vector<128x128xf32>
      %cst_21 = arith.constant 9.99999974E-6 : f32
      %36 = vector.broadcast %cst_21 : f32 to vector<128x1xf32>
      %37 = arith.addf %33, %36 : vector<128x1xf32>
      %38 = math.rsqrt %37 : vector<128x1xf32>
      %39 = vector.broadcast %38 : vector<128x1xf32> to vector<128x128xf32>
      %40 = arith.mulf %35, %39 : vector<128x128xf32>
      %c0_22 = arith.constant 0 : index
      %c0_23 = arith.constant 0 : index
      %41 = vector.load %arg5[%c0_22, %c0_23] : memref<1x128xf32, #tpu.memory_space<vmem>>, vector<1x128xf32>
      %42 = vector.broadcast %41 : vector<1x128xf32> to vector<128x128xf32>
      %43 = arith.mulf %40, %42 : vector<128x128xf32>
      %c0_24 = arith.constant 0 : index
      %c0_25 = arith.constant 0 : index
      %44 = vector.load %arg6[%c0_24, %c0_25] : memref<1x128xf32, #tpu.memory_space<vmem>>, vector<1x128xf32>
      %45 = vector.broadcast %44 : vector<1x128xf32> to vector<128x128xf32>
      %46 = arith.addf %43, %45 : vector<128x128xf32>
      %c0_26 = arith.constant 0 : index
      %c0_27 = arith.constant 0 : index
      %47 = vector.load %arg7[%c0_26, %c0_27] : memref<128x128xf32, #tpu.memory_space<vmem>>, vector<128x128xf32>
      tpu.vector_store %arg7[%c0_26, %c0_27], %46 {strides = array<i32>} : memref<128x128xf32, #tpu.memory_space<vmem>>, vector<128x128xf32>,
    } else {
    }
    return
  }
  func.func @transform_0(%arg0: i32, %arg1: i32) -> (i32, i32) {
    %c0_i32 = arith.constant 0 : i32
    %c0_i32_0 = arith.constant 0 : i32
    return %arg0, %c0_i32 : i32, i32
  }
  func.func @transform_1(%arg0: i32, %arg1: i32) -> (i32, i32) {
    %c0_i32 = arith.constant 0 : i32
    %c0_i32_0 = arith.constant 0 : i32
    return %c0_i32, %arg1 : i32, i32
  }
  func.func @transform_2(%arg0: i32, %arg1: i32) -> (i32, i32) {
    %c0_i32 = arith.constant 0 : i32
    %c0_i32_0 = arith.constant 0 : i32
    return %arg1, %c0_i32 : i32, i32
  }
  func.func @transform_3(%arg0: i32, %arg1: i32) -> (i32, i32) {
    %c0_i32 = arith.constant 0 : i32
    %c0_i32_0 = arith.constant 0 : i32
    %c0_i32_1 = arith.constant 0 : i32
    return %c0_i32, %c0_i32_0 : i32, i32
  }
  func.func @transform_4(%arg0: i32, %arg1: i32) -> (i32, i32) {
    %c0_i32 = arith.constant 0 : i32
    %c0_i32_0 = arith.constant 0 : i32
    %c0_i32_1 = arith.constant 0 : i32
    return %c0_i32, %c0_i32_0 : i32, i32
  }
  func.func @transform_5(%arg0: i32, %arg1: i32) -> (i32, i32) {
    %c0_i32 = arith.constant 0 : i32
    %c0_i32_0 = arith.constant 0 : i32
    return %arg0, %c0_i32 : i32, i32
  }
}

</mosaic_0001>

<llo_original>
// kernel: tpu_custom_call.1
$region0: #{tpu_custom_call.1}
  #allocation0 [shape = 'u32[]', space=smem, size = 0x4, offset = 0x4, fixed_abs, tag = 'smem constant byte address 0x4 - core index']
  #allocation1 [shape = 'u32[144,128]{1,0:T(1,128)}', space=vmem, size = 0x12000, scoped, tag = 'internal scratch']
  #allocation2 [shape = 'f32[128,128]{1,0:T(8,128)}', space=vmem, size = 0x10000, scoped, tag = 'scratch operand']
  %s0 = inlined_call_operand.hbm [shape: bf16[256,128], index: 0, kind: input, shape index: {}]
  %s1 = inlined_call_operand.hbm [shape: bf16[128,512], index: 1, kind: input, shape index: {}]
  %s2 = inlined_call_operand.hbm [shape: bf16[512,128], index: 2, kind: input, shape index: {}]
  %s3 = inlined_call_operand.vmem [shape: f32[1,128], index: 3, kind: input, shape index: {}]
  %s4 = inlined_call_operand.vmem [shape: f32[1,128], index: 4, kind: input, shape index: {}]
  %s5 = inlined_call_operand.hbm [shape: f32[256,128], index: 5, kind: output, shape index: {}]
  %s6 = sld [smem:[#allocation0]]
  $region73: #{tpu_custom_call.1} parent=0
    _
  %s8 = ssub.s32 1, %s6
  %s9 = scalar_select 0, %s8, %s6
  $region1: #{tpu_custom_call.1} parent=0
    #allocation3 [shape = 'u8[65536]{0}', space=vmem, size = 0x10000, scoped, tag = 'input window, operand 0']
    #allocation4 [shape = 's32[2]{0}', space=sflag, size = 0x8, scoped, tag = 'scoped memory for tpu_custom_call.1']
    #allocation5 [shape = 's32[2]{0}', space=sflag, size = 0x8, scoped, tag = 'scoped memory for tpu_custom_call.1']
    #allocation6 [shape = 'u8[131072]{0}', space=vmem, size = 0x20000, scoped, tag = 'input window, operand 1']
    #allocation7 [shape = 's32[2]{0}', space=sflag, size = 0x8, scoped, tag = 'scoped memory for tpu_custom_call.1']
    #allocation8 [shape = 'u8[131072]{0}', space=vmem, size = 0x20000, scoped, tag = 'input window, operand 2']
    #allocation9 [shape = 'u8[131072]{0}', space=vmem, size = 0x20000, scoped, tag = 'output window, operand 0']
    %10 = vsyncpa [#allocation4], 0
    %s11 = scalar_lea.sflag [#allocation4], 1
    %12 = vsyncpa %s11, 0
    %13 = vsyncpa [#allocation7], 0
    %s14 = scalar_lea.sflag [#allocation7], 1
    %15 = vsyncpa %s14, 0
    %16 = vsyncpa [#allocation5], 0
    %s17 = scalar_lea.sflag [#allocation5], 1
    %18 = vsyncpa %s17, 0
    loop: start=0, step=1, limit=6
    $region2: #{tpu_custom_call.1} parent=1 // loop_pre_header
      _
    $region3: #{tpu_custom_call.1} parent=1 // loop_header
      %s20 = sphi 0, %s24
      %p21 = scmp.ge.s32.totalorder %s20, 6
      %s27 = sphi 0, %s39
      %s28 = sphi 0, %s35
      %s29 = sphi 0, %s27
      %s30 = sphi 0, %s28
      %s31 = sphi 0, %s29
      %s32 = sphi 0, %s30
      %s42 = sphi 0, %s44
      %s45 = sphi 0, %s42
      %s46 = sphi 0, %s45
      %s62 = sphi 0, %s46
      %s68 = sphi 0, %s70
      %s71 = sphi 0, %s68
      %s72 = sphi 0, %s71
      %s88 = sphi 0, %s72
      %s94 = sphi 0, %s96
      %s97 = sphi 0, %s94
      %s98 = sphi 0, %s97
      %s114 = sphi 0, %s98
      %s118 = sphi 0, %s118
      %s120 = sphi 0, %s118
      %s121 = sphi 0, %s120
      %s135 = sphi 0, %s121
      %s139 = sphi 0, %s139
      %s141 = sphi 0, %s139
      %s142 = sphi 0, %s141
      %s156 = sphi 0, %s142
      %s162 = sphi 0, %s164
      %s165 = sphi 0, %s162
      %s166 = sphi 0, %s165
      %s182 = sphi 0, %s166
    $region4: #{tpu_custom_call.1} parent=1 // loop_header_branch
      %23 = sbr.rel (%p21) target = $region8
    $region5: #{tpu_custom_call.1} parent=1 // loop_body
      %s25 = ssub.s32 %s20, 1
      %s26 = ssub.s32 %s20, 2
      %s33 = sadd.s32 1, %s28
      %p34 = scmp.ge.s32.totalorder %s33, 2
      %s35 = scalar_select %p34, 0, %s33
      %s36 = sadd.s32 1, %s27
      %s37 = scalar_select %p34, %s36, %s27
      %p38 = scmp.ge.s32.totalorder %s37, 2
      %s39 = scalar_select %p38, 0, %s37
      %s40 = ssub.s32 %s27, %s39
      %p41 = scmp.eq.s32.totalorder %s40, 0
      %s43 = sadd.s32 %s42, 1
      %s44 = scalar_select %p41, %s42, %s43
      %p47 = pneg %p41
      %p48 = scmp.eq.s32.totalorder %s20, 3
      %p49 = por %p47, %p48
      %p50 = scmp.ne.s32.totalorder %s42, %s45
      %p51 = scmp.eq.s32.totalorder %s20, 0
      %p52 = por %p50, %p51
      %p53 = scmp.ne.s32.totalorder %s42, %s45
      %p54 = scmp.eq.s32.totalorder %s25, 3
      %p55 = por %p53, %p54
      %p56 = scmp.ne.s32.totalorder %s45, %s46
      %p57 = scmp.eq.s32.totalorder %s25, 0
      %p58 = por %p56, %p57
      %p59 = scmp.ne.s32.totalorder %s45, %s46
      %p60 = scmp.eq.s32.totalorder %s26, 3
      %p61 = por %p59, %p60
      %p63 = scmp.ne.s32.totalorder %s46, %s62
      %p64 = scmp.eq.s32.totalorder %s26, 0
      %p65 = por %p63, %p64
      %s66 = ssub.s32 %s28, %s35
      %p67 = scmp.eq.s32.totalorder %s66, 0
      %s69 = sadd.s32 %s68, 1
      %s70 = scalar_select %p67, %s68, %s69
      %p73 = pneg %p67
      %p74 = scmp.eq.s32.totalorder %s20, 3
      %p75 = por %p73, %p74
      %p76 = scmp.ne.s32.totalorder %s68, %s71
      %p77 = scmp.eq.s32.totalorder %s20, 0
      %p78 = por %p76, %p77
      %p79 = scmp.ne.s32.totalorder %s68, %s71
      %p80 = scmp.eq.s32.totalorder %s25, 3
      %p81 = por %p79, %p80
      %p82 = scmp.ne.s32.totalorder %s71, %s72
      %p83 = scmp.eq.s32.totalorder %s25, 0
      %p84 = por %p82, %p83
      %p85 = scmp.ne.s32.totalorder %s71, %s72
      %p86 = scmp.eq.s32.totalorder %s26, 3
      %p87 = por %p85, %p86
      %p89 = scmp.ne.s32.totalorder %s72, %s88
      %p90 = scmp.eq.s32.totalorder %s26, 0
      %p91 = por %p89, %p90
      %s92 = ssub.s32 %s28, %s35
      %p93 = scmp.eq.s32.totalorder %s92, 0
      %s95 = sadd.s32 %s94, 1
      %s96 = scalar_select %p93, %s94, %s95
      %p99 = pneg %p93
      %p100 = scmp.eq.s32.totalorder %s20, 3
      %p101 = por %p99, %p100
      %p102 = scmp.ne.s32.totalorder %s94, %s97
      %p103 = scmp.eq.s32.totalorder %s20, 0
      %p104 = por %p102, %p103
      %p105 = scmp.ne.s32.totalorder %s94, %s97
      %p106 = scmp.eq.s32.totalorder %s25, 3
      %p107 = por %p105, %p106
      %p108 = scmp.ne.s32.totalorder %s97, %s98
      %p109 = scmp.eq.s32.totalorder %s25, 0
      %p110 = por %p108, %p109
      %p111 = scmp.ne.s32.totalorder %s97, %s98
      %p112 = scmp.eq.s32.totalorder %s26, 3
      %p113 = por %p111, %p112
      %p115 = scmp.ne.s32.totalorder %s98, %s114
      %p116 = scmp.eq.s32.totalorder %s26, 0
      %p117 = por %p115, %p116
      %s119 = sadd.s32 %s118, 1
      %p122 = scmp.eq.s32.totalorder %s20, 3
      %p123 = scmp.ne.s32.totalorder %s118, %s120
      %p124 = scmp.eq.s32.totalorder %s20, 0
      %p125 = por %p123, %p124
      %p126 = scmp.ne.s32.totalorder %s118, %s120
      %p127 = scmp.eq.s32.totalorder %s25, 3
      %p128 = por %p126, %p127
      %p129 = scmp.ne.s32.totalorder %s120, %s121
      %p130 = scmp.eq.s32.totalorder %s25, 0
      %p131 = por %p129, %p130
      %p132 = scmp.ne.s32.totalorder %s120, %s121
      %p133 = scmp.eq.s32.totalorder %s26, 3
      %p134 = por %p132, %p133
      %p136 = scmp.ne.s32.totalorder %s121, %s135
      %p137 = scmp.eq.s32.totalorder %s26, 0
      %p138 = por %p136, %p137
      %s140 = sadd.s32 %s139, 1
      %p143 = scmp.eq.s32.totalorder %s20, 3
      %p144 = scmp.ne.s32.totalorder %s139, %s141
      %p145 = scmp.eq.s32.totalorder %s20, 0
      %p146 = por %p144, %p145
      %p147 = scmp.ne.s32.totalorder %s139, %s141
      %p148 = scmp.eq.s32.totalorder %s25, 3
      %p149 = por %p147, %p148
      %p150 = scmp.ne.s32.totalorder %s141, %s142
      %p151 = scmp.eq.s32.totalorder %s25, 0
      %p152 = por %p150, %p151
      %p153 = scmp.ne.s32.totalorder %s141, %s142
      %p154 = scmp.eq.s32.totalorder %s26, 3
      %p155 = por %p153, %p154
      %p157 = scmp.ne.s32.totalorder %s142, %s156
      %p158 = scmp.eq.s32.totalorder %s26, 0
      %p159 = por %p157, %p158
      %s160 = ssub.s32 %s27, %s39
      %p161 = scmp.eq.s32.totalorder %s160, 0
      %s163 = sadd.s32 %s162, 1
      %s164 = scalar_select %p161, %s162, %s163
      %p167 = pneg %p161
      %p168 = scmp.eq.s32.totalorder %s20, 3
      %p169 = por %p167, %p168
      %p170 = scmp.ne.s32.totalorder %s162, %s165
      %p171 = scmp.eq.s32.totalorder %s20, 0
      %p172 = por %p170, %p171
      %p173 = scmp.ne.s32.totalorder %s162, %s165
      %p174 = scmp.eq.s32.totalorder %s25, 3
      %p175 = por %p173, %p174
      %p176 = scmp.ne.s32.totalorder %s165, %s166
      %p177 = scmp.eq.s32.totalorder %s25, 0
      %p178 = por %p176, %p177
      %p179 = scmp.ne.s32.totalorder %s165, %s166
      %p180 = scmp.eq.s32.totalorder %s26, 3
      %p181 = por %p179, %p180
      %p183 = scmp.ne.s32.totalorder %s166, %s182
      %p184 = scmp.eq.s32.totalorder %s26, 0
      %p185 = por %p183, %p184
      %p186 = scmp.le.s32.totalorder 1, %s20
      %p187 = scmp.lt.s32.totalorder %s20, 5
      %p188 = pnand %p186, %p187
      %p189 = pneg %p188
      // Predicated region
      $region9: #{tpu_custom_call.1} parent=5 // pred_check
        _
      $region10: #{tpu_custom_call.1} parent=5 // pred_check_branch
        %191 = sbr.rel (%p188) target = $region12
      $region11: #{tpu_custom_call.1} parent=5 // pred_region
        %s192 = ssub.s32 %s20, 1
        // Predicated region
        $region13: #{tpu_custom_call.1} parent=11 // pred_check
          %p193 = pneg %p131
        $region14: #{tpu_custom_call.1} parent=11 // pred_check_branch
          %195 = sbr.rel (%p193) target = $region16
        $region15: #{tpu_custom_call.1} parent=11 // pred_region
          _
        $region16: #{tpu_custom_call.1} parent=11 // pred_fallthru
          _
        // Predicated region
        $region17: #{tpu_custom_call.1} parent=11 // pred_check
          %p196 = pneg %p152
        $region18: #{tpu_custom_call.1} parent=11 // pred_check_branch
          %198 = sbr.rel (%p196) target = $region20
        $region19: #{tpu_custom_call.1} parent=11 // pred_region
          _
        $region20: #{tpu_custom_call.1} parent=11 // pred_fallthru
          _
      $region12: #{tpu_custom_call.1} parent=5 // pred_fallthru
        _
      %p199 = scmp.lt.s32.totalorder %s20, 4
      // Predicated region
      $region21: #{tpu_custom_call.1} parent=5 // pred_check
        %p200 = pneg %p199
      $region22: #{tpu_custom_call.1} parent=5 // pred_check_branch
        %202 = sbr.rel (%p200) target = $region24
      $region23: #{tpu_custom_call.1} parent=5 // pred_region
        // Predicated region
        $region25: #{tpu_custom_call.1} parent=23 // pred_check
          %p203 = pneg %p52
        $region26: #{tpu_custom_call.1} parent=23 // pred_check_branch
          %205 = sbr.rel (%p203) target = $region28
        $region27: #{tpu_custom_call.1} parent=23 // pred_region
          %s206 = sand.u32 %s42, 1
          %s207 = scalar_lea.sflag [#allocation4], %s206
          %s208 = sand.u32 %s42, 1
          %s209 = smul.addr %s208, 64
          %s210 = scalar_lea.vmem [#allocation3], %s209
          %s211 = smul.u32 16, %s27
          %s213 = ssub.s32 1024, 1024
          %214 = vsyncadd %s207, %s213
          %s215 = smul.addr %s211, 64
          %s216 = scalar_lea.hbm %s0, %s215
          %s217 = sshll.u32 %s210, 4
          %s218 = int_to_ptr.vmem [resolvable:$true] %s217
          %223 = dma.hbm_to_vmem [thread:$0]  %s216, 1024, %s218, %s207, 64, 64, 4
        $region28: #{tpu_custom_call.1} parent=23 // pred_fallthru
          _
        // Predicated region
        $region29: #{tpu_custom_call.1} parent=23 // pred_check
          %p224 = pneg %p78
        $region30: #{tpu_custom_call.1} parent=23 // pred_check_branch
          %226 = sbr.rel (%p224) target = $region32
        $region31: #{tpu_custom_call.1} parent=23 // pred_region
          %s227 = sand.u32 %s20, 1
          %s228 = scalar_lea.sflag [#allocation7], %s227
          %s229 = sand.u32 %s68, 1
          %s230 = smul.addr %s229, 128
          %s231 = scalar_lea.vmem [#allocation6], %s230
          %s232 = smul.u32 2, %s28
          %s234 = ssub.s32 2048, 2048
          %235 = vsyncadd %s228, %s234
          %s236 = smul.addr %s232, 64
          %s237 = scalar_lea.hbm %s1, %s236
          %s238 = sshll.u32 %s231, 4
          %s239 = int_to_ptr.vmem [resolvable:$true] %s238
          %244 = dma.hbm_to_vmem [thread:$0]  %s237, 2048, %s239, %s228, 256, 128, 8
        $region32: #{tpu_custom_call.1} parent=23 // pred_fallthru
          _
        // Predicated region
        $region33: #{tpu_custom_call.1} parent=23 // pred_check
          %p245 = pneg %p104
        $region34: #{tpu_custom_call.1} parent=23 // pred_check_branch
          %247 = sbr.rel (%p245) target = $region36
        $region35: #{tpu_custom_call.1} parent=23 // pred_region
          %s248 = sand.u32 %s20, 1
          %s249 = scalar_lea.sflag [#allocation7], %s248
          %s250 = sand.u32 %s94, 1
          %s251 = smul.addr %s250, 128
          %s252 = scalar_lea.vmem [#allocation8], %s251
          %s253 = smul.u32 32, %s28
          %s255 = ssub.s32 2048, 2048
          %256 = vsyncadd %s249, %s255
          %s257 = smul.addr %s253, 64
          %s258 = scalar_lea.hbm %s2, %s257
          %s259 = sshll.u32 %s252, 4
          %s260 = int_to_ptr.vmem [resolvable:$true] %s259
          %265 = dma.hbm_to_vmem [thread:$0]  %s258, 2048, %s260, %s249, 64, 64, 4
        $region36: #{tpu_custom_call.1} parent=23 // pred_fallthru
          _
      $region24: #{tpu_custom_call.1} parent=5 // pred_fallthru
        _
      %p266 = scmp.le.s32.totalorder 1, %s20
      %p267 = scmp.lt.s32.totalorder %s20, 5
      %p268 = pnand %p266, %p267
      %p269 = pneg %p268
      // Predicated region
      $region37: #{tpu_custom_call.1} parent=5 // pred_check
        _
      $region38: #{tpu_custom_call.1} parent=5 // pred_check_branch
        %271 = sbr.rel (%p268) target = $region40
      $region39: #{tpu_custom_call.1} parent=5 // pred_region
        %s272 = ssub.s32 %s20, 1
        %s273 = sand.u32 %s45, 1
        %s274 = scalar_lea.sflag [#allocation4], %s273
        %s275 = sand.u32 %s45, 1
        %s276 = smul.addr %s275, 64
        %s277 = scalar_lea.vmem [#allocation3], %s276
        // Predicated region
        $region41: #{tpu_custom_call.1} parent=39 // pred_check
          %p278 = pneg %p58
        $region42: #{tpu_custom_call.1} parent=39 // pred_check_branch
          %280 = sbr.rel (%p278) target = $region44
        $region43: #{tpu_custom_call.1} parent=39 // pred_region
          %281 = dma.done %s274, 1024
        $region44: #{tpu_custom_call.1} parent=39 // pred_fallthru
          _
        %s282 = sand.u32 %s25, 1
        %s283 = scalar_lea.sflag [#allocation7], %s282
        %s284 = sand.u32 %s71, 1
        %s285 = smul.addr %s284, 128
        %s286 = scalar_lea.vmem [#allocation6], %s285
        // Predicated region
        $region45: #{tpu_custom_call.1} parent=39 // pred_check
          %p287 = pneg %p84
        $region46: #{tpu_custom_call.1} parent=39 // pred_check_branch
          %289 = sbr.rel (%p287) target = $region48
        $region47: #{tpu_custom_call.1} parent=39 // pred_region
          %290 = dma.done %s283, 2048
        $region48: #{tpu_custom_call.1} parent=39 // pred_fallthru
          _
        %s291 = sand.u32 %s25, 1
        %s292 = scalar_lea.sflag [#allocation7], %s291
        %s293 = sand.u32 %s97, 1
        %s294 = smul.addr %s293, 128
        %s295 = scalar_lea.vmem [#allocation8], %s294
        // Predicated region
        $region49: #{tpu_custom_call.1} parent=39 // pred_check
          %p296 = pneg %p110
        $region50: #{tpu_custom_call.1} parent=39 // pred_check_branch
          %298 = sbr.rel (%p296) target = $region52
        $region51: #{tpu_custom_call.1} parent=39 // pred_region
          %299 = dma.done %s292, 2048
        $region52: #{tpu_custom_call.1} parent=39 // pred_fallthru
          _
        %s300 = sand.u32 %s45, 1
        %s301 = scalar_lea.sflag [#allocation4], %s300
        %s302 = sand.u32 %s45, 1
        %s303 = smul.addr %s302, 64
        %s304 = scalar_lea.vmem [#allocation3], %s303
        %p305 = pneg %p58
        %p306 = pneg %p55
        %s307 = sand.u32 %s25, 1
        %s308 = scalar_lea.sflag [#allocation7], %s307
        %s309 = sand.u32 %s71, 1
        %s310 = smul.addr %s309, 128
        %s311 = scalar_lea.vmem [#allocation6], %s310
        %p312 = pneg %p84
        %p313 = pneg %p81
        %s314 = sand.u32 %s25, 1
        %s315 = scalar_lea.sflag [#allocation7], %s314
        %s316 = sand.u32 %s97, 1
        %s317 = smul.addr %s316, 128
        %s318 = scalar_lea.vmem [#allocation8], %s317
        %p319 = pneg %p110
        %p320 = pneg %p107
        %p321 = pneg %p131
        %p322 = pneg %p128
        %p323 = pneg %p152
        %p324 = pneg %p149
        %p325 = pneg %p178
        %p326 = pneg %p175
        %s327 = sand.u32 %s165, 1
        %s328 = scalar_lea.sflag [#allocation5], %s327
        %s329 = sand.u32 %s165, 1
        %s330 = smul.addr %s329, 128
        %s331 = scalar_lea.vmem [#allocation9], %s330
        %s332 = smul.u32 16, %s29
        %s333 = smul.u32 2, %s30
        %s334 = smul.u32 32, %s30
        %s335 = smul.u32 16, %s29
        %p337 = scmp.eq.s32.totalorder %s30, 0
        // Predicated region
        $region53: #{tpu_custom_call.1} parent=39 // pred_check
          %p338 = pneg %p337
        $region54: #{tpu_custom_call.1} parent=39 // pred_check_branch
          %340 = sbr.rel (%p338) target = $region56
        $region55: #{tpu_custom_call.1} parent=39 // pred_region
          %341 = vst [vmem:[#allocation2] sm:$0xff] 0.0
          %342 = vst [vmem:[#allocation2 + $0x8] sm:$0xff] 0.0
          %343 = vst [vmem:[#allocation2 + $0x10] sm:$0xff] 0.0
          %344 = vst [vmem:[#allocation2 + $0x18] sm:$0xff] 0.0
          %345 = vst [vmem:[#allocation2 + $0x20] sm:$0xff] 0.0
          %346 = vst [vmem:[#allocation2 + $0x28] sm:$0xff] 0.0
          %347 = vst [vmem:[#allocation2 + $0x30] sm:$0xff] 0.0
          %348 = vst [vmem:[#allocation2 + $0x38] sm:$0xff] 0.0
          %349 = vst [vmem:[#allocation2 + $0x40] sm:$0xff] 0.0
          %350 = vst [vmem:[#allocation2 + $0x48] sm:$0xff] 0.0
          %351 = vst [vmem:[#allocation2 + $0x50] sm:$0xff] 0.0
          %352 = vst [vmem:[#allocation2 + $0x58] sm:$0xff] 0.0
          %353 = vst [vmem:[#allocation2 + $0x60] sm:$0xff] 0.0
          %354 = vst [vmem:[#allocation2 + $0x68] sm:$0xff] 0.0
          %355 = vst [vmem:[#allocation2 + $0x70] sm:$0xff] 0.0
          %356 = vst [vmem:[#allocation2 + $0x78] sm:$0xff] 0.0
        $region56: #{tpu_custom_call.1} parent=39 // pred_fallthru
          _
        %v357 = vld [vmem:[%s277] sm:$0xf]
        %v358 = vld [vmem:[%s277 + $0x4] sm:$0xf]
        %v359 = vld [vmem:[%s277 + $0x8] sm:$0xf]
        %v360 = vld [vmem:[%s277 + $0xc] sm:$0xf]
        %v361 = vld [vmem:[%s277 + $0x10] sm:$0xf]
        %v362 = vld [vmem:[%s277 + $0x14] sm:$0xf]
        %v363 = vld [vmem:[%s277 + $0x18] sm:$0xf]
        %v364 = vld [vmem:[%s277 + $0x1c] sm:$0xf]
        %v365 = vld [vmem:[%s277 + $0x20] sm:$0xf]
        %v366 = vld [vmem:[%s277 + $0x24] sm:$0xf]
        %v367 = vld [vmem:[%s277 + $0x28] sm:$0xf]
        %v368 = vld [vmem:[%s277 + $0x2c] sm:$0xf]
        %v369 = vld [vmem:[%s277 + $0x30] sm:$0xf]
        %v370 = vld [vmem:[%s277 + $0x34] sm:$0xf]
        %v371 = vld [vmem:[%s277 + $0x38] sm:$0xf]
        %v372 = vld [vmem:[%s277 + $0x3c] sm:$0xf]
        %v373 = vld [vmem:[%s286] sm:$0xff]
        %v374 = vld [vmem:[%s286 + $0x8] sm:$0xff]
        %v375 = vld [vmem:[%s286 + $0x10] sm:$0xff]
        %v376 = vld [vmem:[%s286 + $0x18] sm:$0xff]
        %v377 = vld [vmem:[%s286 + $0x20] sm:$0xff]
        %v378 = vld [vmem:[%s286 + $0x28] sm:$0xff]
        %v379 = vld [vmem:[%s286 + $0x30] sm:$0xff]
        %v380 = vld [vmem:[%s286 + $0x38] sm:$0xff]
        %v381 = vld [vmem:[%s286 + $0x40] sm:$0xff]
        %v382 = vld [vmem:[%s286 + $0x48] sm:$0xff]
        %v383 = vld [vmem:[%s286 + $0x50] sm:$0xff]
        %v384 = vld [vmem:[%s286 + $0x58] sm:$0xff]
        %v385 = vld [vmem:[%s286 + $0x60] sm:$0xff]
        %v386 = vld [vmem:[%s286 + $0x68] sm:$0xff]
        %v387 = vld [vmem:[%s286 + $0x70] sm:$0xff]
        %v388 = vld [vmem:[%s286 + $0x78] sm:$0xff]
        %v405 = vunpack.c.l.b16 %v357
        %v406 = vunpack.c.l.b16 %v358
        %v407 = vunpack.c.l.b16 %v359
        %v408 = vunpack.c.l.b16 %v360
        %v409 = vunpack.c.l.b16 %v361
        %v410 = vunpack.c.l.b16 %v362
        %v411 = vunpack.c.l.b16 %v363
        %v412 = vunpack.c.l.b16 %v364
        %v413 = vunpack.c.l.b16 %v365
        %v414 = vunpack.c.l.b16 %v366
        %v415 = vunpack.c.l.b16 %v367
        %v416 = vunpack.c.l.b16 %v368
        %v417 = vunpack.c.l.b16 %v369
        %v418 = vunpack.c.l.b16 %v370
        %v419 = vunpack.c.l.b16 %v371
        %v420 = vunpack.c.l.b16 %v372
        %v421 = vpack.c.b16 %v406, %v405
        %v422 = vpack.c.b16 %v408, %v407
        %v423 = vpack.c.b16 %v410, %v409
        %v424 = vpack.c.b16 %v412, %v411
        %v425 = vpack.c.b16 %v414, %v413
        %v426 = vpack.c.b16 %v416, %v415
        %v427 = vpack.c.b16 %v418, %v417
        %v428 = vpack.c.b16 %v420, %v419
        %v453 = vunpack.c.l.b16 %v373
        %v454 = vunpack.c.h.b16 %v373
        %v455 = vunpack.c.l.b16 %v374
        %v456 = vunpack.c.h.b16 %v374
        %v457 = vunpack.c.l.b16 %v375
        %v458 = vunpack.c.h.b16 %v375
        %v459 = vunpack.c.l.b16 %v376
        %v460 = vunpack.c.h.b16 %v376
        %v461 = vunpack.c.l.b16 %v377
        %v462 = vunpack.c.h.b16 %v377
        %v463 = vunpack.c.l.b16 %v378
        %v464 = vunpack.c.h.b16 %v378
        %v465 = vunpack.c.l.b16 %v379
        %v466 = vunpack.c.h.b16 %v379
        %v467 = vunpack.c.l.b16 %v380
        %v468 = vunpack.c.h.b16 %v380
        %v469 = vunpack.c.l.b16 %v381
        %v470 = vunpack.c.h.b16 %v381
        %v471 = vunpack.c.l.b16 %v382
        %v472 = vunpack.c.h.b16 %v382
        %v473 = vunpack.c.l.b16 %v383
        %v474 = vunpack.c.h.b16 %v383
        %v475 = vunpack.c.l.b16 %v384
        %v476 = vunpack.c.h.b16 %v384
        %v477 = vunpack.c.l.b16 %v385
        %v478 = vunpack.c.h.b16 %v385
        %v479 = vunpack.c.l.b16 %v386
        %v480 = vunpack.c.h.b16 %v386
        %v481 = vunpack.c.l.b16 %v387
        %v482 = vunpack.c.h.b16 %v387
        %v483 = vunpack.c.l.b16 %v388
        %v484 = vunpack.c.h.b16 %v388
        %v485 = vpack.c.b16 %v455, %v453
        %v486 = vpack.c.b16 %v456, %v454
        %v487 = vpack.c.b16 %v459, %v457
        %v488 = vpack.c.b16 %v460, %v458
        %v489 = vpack.c.b16 %v463, %v461
        %v490 = vpack.c.b16 %v464, %v462
        %v491 = vpack.c.b16 %v467, %v465
        %v492 = vpack.c.b16 %v468, %v466
        %v493 = vpack.c.b16 %v471, %v469
        %v494 = vpack.c.b16 %v472, %v470
        %v495 = vpack.c.b16 %v475, %v473
        %v496 = vpack.c.b16 %v476, %v474
        %v497 = vpack.c.b16 %v479, %v477
        %v498 = vpack.c.b16 %v480, %v478
        %v499 = vpack.c.b16 %v483, %v481
        %v500 = vpack.c.b16 %v484, %v482
        %517 = vmatprep.subr.bf16.mxu0 %v486
        %518 = vmatpush1.bf16.msra.mxu0 %v485
        %519 = vmatprep.subr.bf16.mxu0 %v488
        %520 = vmatpush1.bf16.msra.mxu0 %v487
        %521 = vmatprep.subr.bf16.mxu0 %v490
        %522 = vmatpush1.bf16.msra.mxu0 %v489
        %523 = vmatprep.subr.bf16.mxu0 %v492
        %524 = vmatpush1.bf16.msra.mxu0 %v491
        %525 = vmatprep.subr.bf16.mxu0 %v494
        %526 = vmatpush1.bf16.msra.mxu0 %v493
        %527 = vmatprep.subr.bf16.mxu0 %v496
        %528 = vmatpush1.bf16.msra.mxu0 %v495
        %529 = vmatprep.subr.bf16.mxu0 %v498
        %530 = vmatpush1.bf16.msra.mxu0 %v497
        %531 = vmatprep.subr.bf16.mxu0 %v500
        %532 = vmatpush1.bf16.msra.mxu0 %v499
        %533 = vmatprep.subr.bf16.mxu0 0
        %534 = vmatpush1.bf16.msra.mxu0 0
        %535 = vmatprep.subr.bf16.mxu0 0
        %536 = vmatpush1.bf16.msra.mxu0 0
        %537 = vmatprep.subr.bf16.mxu0 0
        %538 = vmatpush1.bf16.msra.mxu0 0
        %539 = vmatprep.subr.bf16.mxu0 0
        %540 = vmatpush1.bf16.msra.mxu0 0
        %541 = vmatprep.subr.bf16.mxu0 0
        %542 = vmatpush1.bf16.msra.mxu0 0
        %543 = vmatprep.subr.bf16.mxu0 0
        %544 = vmatpush1.bf16.msra.mxu0 0
        %545 = vmatprep.subr.bf16.mxu0 0
        %546 = vmatpush1.bf16.msra.mxu0 0
        %547 = vmatprep.subr.bf16.mxu0 0
        %548 = vmatpush1.bf16.msra.mxu0 0
        %549 = vmatprep.mubr.bf16.mxu0 0
        %550 = vmatmul.mubr.bf16.gmra.mrb[0].mxu0 %v421
        %v551 = vpop.f32.mrb[0].mxu0
        %v552 = vadd.f32 0.0, %v551
        %v553 = vpop.f32.mrb[0].mxu0
        %v554 = vadd.f32 0.0, %v553
        %v555 = vpop.f32.mrb[0].mxu0
        %v556 = vadd.f32 0.0, %v555
        %v557 = vpop.f32.mrb[0].mxu0
        %v558 = vadd.f32 0.0, %v557
        %559 = vmatprep.mubr.bf16.mxu0 0
        %560 = vmatmul.mubr.bf16.gmra.mrb[0].mxu0 %v422
        %v561 = vpop.f32.mrb[0].mxu0
        %v562 = vadd.f32 0.0, %v561
        %v563 = vpop.f32.mrb[0].mxu0
        %v564 = vadd.f32 0.0, %v563
        %v565 = vpop.f32.mrb[0].mxu0
        %v566 = vadd.f32 0.0, %v565
        %v567 = vpop.f32.mrb[0].mxu0
        %v568 = vadd.f32 0.0, %v567
        %569 = vmatprep.mubr.bf16.mxu0 0
        %570 = vmatmul.mubr.bf16.gmra.mrb[0].mxu0 %v423
        %v571 = vpop.f32.mrb[0].mxu0
        %v572 = vadd.f32 0.0, %v571
        %v573 = vpop.f32.mrb[0].mxu0
        %v574 = vadd.f32 0.0, %v573
        %v575 = vpop.f32.mrb[0].mxu0
        %v576 = vadd.f32 0.0, %v575
        %v577 = vpop.f32.mrb[0].mxu0
        %v578 = vadd.f32 0.0, %v577
        %579 = vmatprep.mubr.bf16.mxu0 0
        %580 = vmatmul.mubr.bf16.gmra.mrb[0].mxu0 %v424
        %v581 = vpop.f32.mrb[0].mxu0
        %v582 = vadd.f32 0.0, %v581
        %v583 = vpop.f32.mrb[0].mxu0
        %v584 = vadd.f32 0.0, %v583
        %v585 = vpop.f32.mrb[0].mxu0
        %v586 = vadd.f32 0.0, %v585
        %v587 = vpop.f32.mrb[0].mxu0
        %v588 = vadd.f32 0.0, %v587
        %589 = vmatprep.mubr.bf16.mxu0 0
        %590 = vmatmul.mubr.bf16.gmra.mrb[0].mxu0 %v425
        %v591 = vpop.f32.mrb[0].mxu0
        %v592 = vadd.f32 0.0, %v591
        %v593 = vpop.f32.mrb[0].mxu0
        %v594 = vadd.f32 0.0, %v593
        %v595 = vpop.f32.mrb[0].mxu0
        %v596 = vadd.f32 0.0, %v595
        %v597 = vpop.f32.mrb[0].mxu0
        %v598 = vadd.f32 0.0, %v597
        %599 = vmatprep.mubr.bf16.mxu0 0
        %600 = vmatmul.mubr.bf16.gmra.mrb[0].mxu0 %v426
        %v601 = vpop.f32.mrb[0].mxu0
        %v602 = vadd.f32 0.0, %v601
        %v603 = vpop.f32.mrb[0].mxu0
        %v604 = vadd.f32 0.0, %v603
        %v605 = vpop.f32.mrb[0].mxu0
        %v606 = vadd.f32 0.0, %v605
        %v607 = vpop.f32.mrb[0].mxu0
        %v608 = vadd.f32 0.0, %v607
        %609 = vmatprep.mubr.bf16.mxu0 0
        %610 = vmatmul.mubr.bf16.gmra.mrb[0].mxu0 %v427
        %v611 = vpop.f32.mrb[0].mxu0
        %v612 = vadd.f32 0.0, %v611
        %v613 = vpop.f32.mrb[0].mxu0
        %v614 = vadd.f32 0.0, %v613
        %v615 = vpop.f32.mrb[0].mxu0
        %v616 = vadd.f32 0.0, %v615
        %v617 = vpop.f32.mrb[0].mxu0
        %v618 = vadd.f32 0.0, %v617
        %619 = vmatprep.mubr.bf16.mxu0 0
        %620 = vmatmul.mubr.bf16.gmra.mrb[0].mxu0 %v428
        %v621 = vpop.f32.mrb[0].mxu0
        %v622 = vadd.f32 0.0, %v621
        %v623 = vpop.f32.mrb[0].mxu0
        %v624 = vadd.f32 0.0, %v623
        %v625 = vpop.f32.mrb[0].mxu0
        %v626 = vadd.f32 0.0, %v625
        %v627 = vpop.f32.mrb[0].mxu0
        %v628 = vadd.f32 0.0, %v627
        %629 = vdwg.mxu0
        %v630 = vmax.f32 %v552, 0.0
        %v631 = vmax.f32 %v554, 0.0
        %v632 = vmax.f32 %v556, 0.0
        %v633 = vmax.f32 %v558, 0.0
        %v634 = vmax.f32 %v562, 0.0
        %v635 = vmax.f32 %v564, 0.0
        %v636 = vmax.f32 %v566, 0.0
        %v637 = vmax.f32 %v568, 0.0
        %v638 = vmax.f32 %v572, 0.0
        %v639 = vmax.f32 %v574, 0.0
        %v640 = vmax.f32 %v576, 0.0
        %v641 = vmax.f32 %v578, 0.0
        %v642 = vmax.f32 %v582, 0.0
        %v643 = vmax.f32 %v584, 0.0
        %v644 = vmax.f32 %v586, 0.0
        %v645 = vmax.f32 %v588, 0.0
        %v646 = vmax.f32 %v592, 0.0
        %v647 = vmax.f32 %v594, 0.0
        %v648 = vmax.f32 %v596, 0.0
        %v649 = vmax.f32 %v598, 0.0
        %v650 = vmax.f32 %v602, 0.0
        %v651 = vmax.f32 %v604, 0.0
        %v652 = vmax.f32 %v606, 0.0
        %v653 = vmax.f32 %v608, 0.0
        %v654 = vmax.f32 %v612, 0.0
        %v655 = vmax.f32 %v614, 0.0
        %v656 = vmax.f32 %v616, 0.0
        %v657 = vmax.f32 %v618, 0.0
        %v658 = vmax.f32 %v622, 0.0
        %v659 = vmax.f32 %v624, 0.0
        %v660 = vmax.f32 %v626, 0.0
        %v661 = vmax.f32 %v628, 0.0
        %v662 = vpack.c.bf16 %v632, %v630
        %v663 = vpack.c.bf16 %v633, %v631
        %v664 = vpack.c.bf16 %v636, %v634
        %v665 = vpack.c.bf16 %v637, %v635
        %v666 = vpack.c.bf16 %v640, %v638
        %v667 = vpack.c.bf16 %v641, %v639
        %v668 = vpack.c.bf16 %v644, %v642
        %v669 = vpack.c.bf16 %v645, %v643
        %v670 = vpack.c.bf16 %v648, %v646
        %v671 = vpack.c.bf16 %v649, %v647
        %v672 = vpack.c.bf16 %v652, %v650
        %v673 = vpack.c.bf16 %v653, %v651
        %v674 = vpack.c.bf16 %v656, %v654
        %v675 = vpack.c.bf16 %v657, %v655
        %v676 = vpack.c.bf16 %v660, %v658
        %v677 = vpack.c.bf16 %v661, %v659
        %v678 = vld [vmem:[#allocation2] sm:$0xff]
        %v679 = vld [vmem:[#allocation2 + $0x8] sm:$0xff]
        %v680 = vld [vmem:[#allocation2 + $0x10] sm:$0xff]
        %v681 = vld [vmem:[#allocation2 + $0x18] sm:$0xff]
        %v682 = vld [vmem:[#allocation2 + $0x20] sm:$0xff]
        %v683 = vld [vmem:[#allocation2 + $0x28] sm:$0xff]
        %v684 = vld [vmem:[#allocation2 + $0x30] sm:$0xff]
        %v685 = vld [vmem:[#allocation2 + $0x38] sm:$0xff]
        %v686 = vld [vmem:[#allocation2 + $0x40] sm:$0xff]
        %v687 = vld [vmem:[#allocation2 + $0x48] sm:$0xff]
        %v688 = vld [vmem:[#allocation2 + $0x50] sm:$0xff]
        %v689 = vld [vmem:[#allocation2 + $0x58] sm:$0xff]
        %v690 = vld [vmem:[#allocation2 + $0x60] sm:$0xff]
        %v691 = vld [vmem:[#allocation2 + $0x68] sm:$0xff]
        %v692 = vld [vmem:[#allocation2 + $0x70] sm:$0xff]
        %v693 = vld [vmem:[#allocation2 + $0x78] sm:$0xff]
        %v694 = vld [vmem:[%s295] sm:$0xf]
        %v695 = vld [vmem:[%s295 + $0x4] sm:$0xf]
        %v696 = vld [vmem:[%s295 + $0x8] sm:$0xf]
        %v697 = vld [vmem:[%s295 + $0xc] sm:$0xf]
        %v698 = vld [vmem:[%s295 + $0x10] sm:$0xf]
        %v699 = vld [vmem:[%s295 + $0x14] sm:$0xf]
        %v700 = vld [vmem:[%s295 + $0x18] sm:$0xf]
        %v701 = vld [vmem:[%s295 + $0x1c] sm:$0xf]
        %v702 = vld [vmem:[%s295 + $0x20] sm:$0xf]
        %v703 = vld [vmem:[%s295 + $0x24] sm:$0xf]
        %v704 = vld [vmem:[%s295 + $0x28] sm:$0xf]
        %v705 = vld [vmem:[%s295 + $0x2c] sm:$0xf]
        %v706 = vld [vmem:[%s295 + $0x30] sm:$0xf]
        %v707 = vld [vmem:[%s295 + $0x34] sm:$0xf]
        %v708 = vld [vmem:[%s295 + $0x38] sm:$0xf]
        %v709 = vld [vmem:[%s295 + $0x3c] sm:$0xf]
        %v710 = vld [vmem:[%s295 + $0x40] sm:$0xf]
        %v711 = vld [vmem:[%s295 + $0x44] sm:$0xf]
        %v712 = vld [vmem:[%s295 + $0x48] sm:$0xf]
        %v713 = vld [vmem:[%s295 + $0x4c] sm:$0xf]
        %v714 = vld [vmem:[%s295 + $0x50] sm:$0xf]
        %v715 = vld [vmem:[%s295 + $0x54] sm:$0xf]
        %v716 = vld [vmem:[%s295 + $0x58] sm:$0xf]
        %v717 = vld [vmem:[%s295 + $0x5c] sm:$0xf]
        %v718 = vld [vmem:[%s295 + $0x60] sm:$0xf]
        %v719 = vld [vmem:[%s295 + $0x64] sm:$0xf]
        %v720 = vld [vmem:[%s295 + $0x68] sm:$0xf]
        %v721 = vld [vmem:[%s295 + $0x6c] sm:$0xf]
        %v722 = vld [vmem:[%s295 + $0x70] sm:$0xf]
        %v723 = vld [vmem:[%s295 + $0x74] sm:$0xf]
        %v724 = vld [vmem:[%s295 + $0x78] sm:$0xf]
        %v725 = vld [vmem:[%s295 + $0x7c] sm:$0xf]
        %v758 = vunpack.c.l.b16 %v694
        %v759 = vunpack.c.l.b16 %v695
        %v760 = vunpack.c.l.b16 %v696
        %v761 = vunpack.c.l.b16 %v697
        %v762 = vunpack.c.l.b16 %v698
        %v763 = vunpack.c.l.b16 %v699
        %v764 = vunpack.c.l.b16 %v700
        %v765 = vunpack.c.l.b16 %v701
        %v766 = vunpack.c.l.b16 %v702
        %v767 = vunpack.c.l.b16 %v703
        %v768 = vunpack.c.l.b16 %v704
        %v769 = vunpack.c.l.b16 %v705
        %v770 = vunpack.c.l.b16 %v706
        %v771 = vunpack.c.l.b16 %v707
        %v772 = vunpack.c.l.b16 %v708
        %v773 = vunpack.c.l.b16 %v709
        %v774 = vunpack.c.l.b16 %v710
        %v775 = vunpack.c.l.b16 %v711
        %v776 = vunpack.c.l.b16 %v712
        %v777 = vunpack.c.l.b16 %v713
        %v778 = vunpack.c.l.b16 %v714
        %v779 = vunpack.c.l.b16 %v715
        %v780 = vunpack.c.l.b16 %v716
        %v781 = vunpack.c.l.b16 %v717
        %v782 = vunpack.c.l.b16 %v718
        %v783 = vunpack.c.l.b16 %v719
        %v784 = vunpack.c.l.b16 %v720
        %v785 = vunpack.c.l.b16 %v721
        %v786 = vunpack.c.l.b16 %v722
        %v787 = vunpack.c.l.b16 %v723
        %v788 = vunpack.c.l.b16 %v724
        %v789 = vunpack.c.l.b16 %v725
        %v790 = vpack.c.b16 %v759, %v758
        %v791 = vpack.c.b16 %v761, %v760
        %v792 = vpack.c.b16 %v763, %v762
        %v793 = vpack.c.b16 %v765, %v764
        %v794 = vpack.c.b16 %v767, %v766
        %v795 = vpack.c.b16 %v769, %v768
        %v796 = vpack.c.b16 %v771, %v770
        %v797 = vpack.c.b16 %v773, %v772
        %v798 = vpack.c.b16 %v775, %v774
        %v799 = vpack.c.b16 %v777, %v776
        %v800 = vpack.c.b16 %v779, %v778
        %v801 = vpack.c.b16 %v781, %v780
        %v802 = vpack.c.b16 %v783, %v782
        %v803 = vpack.c.b16 %v785, %v784
        %v804 = vpack.c.b16 %v787, %v786
        %v805 = vpack.c.b16 %v789, %v788
        %822 = vmatprep.subr.bf16.mxu0 0
        %823 = vmatpush1.bf16.msra.mxu0 %v790
        %824 = vmatprep.subr.bf16.mxu0 0
        %825 = vmatpush1.bf16.msra.mxu0 %v791
        %826 = vmatprep.subr.bf16.mxu0 0
        %827 = vmatpush1.bf16.msra.mxu0 %v792
        %828 = vmatprep.subr.bf16.mxu0 0
        %829 = vmatpush1.bf16.msra.mxu0 %v793
        %830 = vmatprep.subr.bf16.mxu0 0
        %831 = vmatpush1.bf16.msra.mxu0 %v794
        %832 = vmatprep.subr.bf16.mxu0 0
        %833 = vmatpush1.bf16.msra.mxu0 %v795
        %834 = vmatprep.subr.bf16.mxu0 0
        %835 = vmatpush1.bf16.msra.mxu0 %v796
        %836 = vmatprep.subr.bf16.mxu0 0
        %837 = vmatpush1.bf16.msra.mxu0 %v797
        %838 = vmatprep.subr.bf16.mxu0 0
        %839 = vmatpush1.bf16.msra.mxu0 %v798
        %840 = vmatprep.subr.bf16.mxu0 0
        %841 = vmatpush1.bf16.msra.mxu0 %v799
        %842 = vmatprep.subr.bf16.mxu0 0
        %843 = vmatpush1.bf16.msra.mxu0 %v800
        %844 = vmatprep.subr.bf16.mxu0 0
        %845 = vmatpush1.bf16.msra.mxu0 %v801
        %846 = vmatprep.subr.bf16.mxu0 0
        %847 = vmatpush1.bf16.msra.mxu0 %v802
        %848 = vmatprep.subr.bf16.mxu0 0
        %849 = vmatpush1.bf16.msra.mxu0 %v803
        %850 = vmatprep.subr.bf16.mxu0 0
        %851 = vmatpush1.bf16.msra.mxu0 %v804
        %852 = vmatprep.subr.bf16.mxu0 0
        %853 = vmatpush1.bf16.msra.mxu0 %v805
        %854 = vmatprep.mubr.bf16.mxu0 %v663
        %855 = vmatmul.mubr.bf16.gmra.mrb[0].mxu0 %v662
        %v856 = vpop.f32.mrb[0].mxu0
        %v857 = vadd.f32 0.0, %v856
        %v858 = vpop.f32.mrb[0].mxu0
        %v859 = vpop.f32.mrb[0].mxu0
        %v860 = vadd.f32 0.0, %v859
        %v861 = vpop.f32.mrb[0].mxu0
        %862 = vmatprep.mubr.bf16.mxu0 %v665
        %863 = vmatmul.mubr.bf16.gmra.mrb[0].mxu0 %v664
        %v864 = vpop.f32.mrb[0].mxu0
        %v865 = vadd.f32 0.0, %v864
        %v866 = vpop.f32.mrb[0].mxu0
        %v867 = vpop.f32.mrb[0].mxu0
        %v868 = vadd.f32 0.0, %v867
        %v869 = vpop.f32.mrb[0].mxu0
        %870 = vmatprep.mubr.bf16.mxu0 %v667
        %871 = vmatmul.mubr.bf16.gmra.mrb[0].mxu0 %v666
        %v872 = vpop.f32.mrb[0].mxu0
        %v873 = vadd.f32 0.0, %v872
        %v874 = vpop.f32.mrb[0].mxu0
        %v875 = vpop.f32.mrb[0].mxu0
        %v876 = vadd.f32 0.0, %v875
        %v877 = vpop.f32.mrb[0].mxu0
        %878 = vmatprep.mubr.bf16.mxu0 %v669
        %879 = vmatmul.mubr.bf16.gmra.mrb[0].mxu0 %v668
        %v880 = vpop.f32.mrb[0].mxu0
        %v881 = vadd.f32 0.0, %v880
        %v882 = vpop.f32.mrb[0].mxu0
        %v883 = vpop.f32.mrb[0].mxu0
        %v884 = vadd.f32 0.0, %v883
        %v885 = vpop.f32.mrb[0].mxu0
        %886 = vmatprep.mubr.bf16.mxu0 %v671
        %887 = vmatmul.mubr.bf16.gmra.mrb[0].mxu0 %v670
        %v888 = vpop.f32.mrb[0].mxu0
        %v889 = vadd.f32 0.0, %v888
        %v890 = vpop.f32.mrb[0].mxu0
        %v891 = vpop.f32.mrb[0].mxu0
        %v892 = vadd.f32 0.0, %v891
        %v893 = vpop.f32.mrb[0].mxu0
        %894 = vmatprep.mubr.bf16.mxu0 %v673
        %895 = vmatmul.mubr.bf16.gmra.mrb[0].mxu0 %v672
        %v896 = vpop.f32.mrb[0].mxu0
        %v897 = vadd.f32 0.0, %v896
        %v898 = vpop.f32.mrb[0].mxu0
        %v899 = vpop.f32.mrb[0].mxu0
        %v900 = vadd.f32 0.0, %v899
        %v901 = vpop.f32.mrb[0].mxu0
        %902 = vmatprep.mubr.bf16.mxu0 %v675
        %903 = vmatmul.mubr.bf16.gmra.mrb[0].mxu0 %v674
        %v904 = vpop.f32.mrb[0].mxu0
        %v905 = vadd.f32 0.0, %v904
        %v906 = vpop.f32.mrb[0].mxu0
        %v907 = vpop.f32.mrb[0].mxu0
        %v908 = vadd.f32 0.0, %v907
        %v909 = vpop.f32.mrb[0].mxu0
        %910 = vmatprep.mubr.bf16.mxu0 %v677
        %911 = vmatmul.mubr.bf16.gmra.mrb[0].mxu0 %v676
        %v912 = vpop.f32.mrb[0].mxu0
        %v913 = vadd.f32 0.0, %v912
        %v914 = vpop.f32.mrb[0].mxu0
        %v915 = vpop.f32.mrb[0].mxu0
        %v916 = vadd.f32 0.0, %v915
        %v917 = vpop.f32.mrb[0].mxu0
        %918 = vdwg.mxu0
        %v919 = vadd.f32 %v678, %v857
        %v920 = vadd.f32 %v679, %v860
        %v921 = vadd.f32 %v680, %v865
        %v922 = vadd.f32 %v681, %v868
        %v923 = vadd.f32 %v682, %v873
        %v924 = vadd.f32 %v683, %v876
        %v925 = vadd.f32 %v684, %v881
        %v926 = vadd.f32 %v685, %v884
        %v927 = vadd.f32 %v686, %v889
        %v928 = vadd.f32 %v687, %v892
        %v929 = vadd.f32 %v688, %v897
        %v930 = vadd.f32 %v689, %v900
        %v931 = vadd.f32 %v690, %v905
        %v932 = vadd.f32 %v691, %v908
        %v933 = vadd.f32 %v692, %v913
        %v934 = vadd.f32 %v693, %v916
        %935 = vst [vmem:[#allocation2] sm:$0xff] %v919
        %936 = vst [vmem:[#allocation2 + $0x8] sm:$0xff] %v920
        %937 = vst [vmem:[#allocation2 + $0x10] sm:$0xff] %v921
        %938 = vst [vmem:[#allocation2 + $0x18] sm:$0xff] %v922
        %939 = vst [vmem:[#allocation2 + $0x20] sm:$0xff] %v923
        %940 = vst [vmem:[#allocation2 + $0x28] sm:$0xff] %v924
        %941 = vst [vmem:[#allocation2 + $0x30] sm:$0xff] %v925
        %942 = vst [vmem:[#allocation2 + $0x38] sm:$0xff] %v926
        %943 = vst [vmem:[#allocation2 + $0x40] sm:$0xff] %v927
        %944 = vst [vmem:[#allocation2 + $0x48] sm:$0xff] %v928
        %945 = vst [vmem:[#allocation2 + $0x50] sm:$0xff] %v929
        %946 = vst [vmem:[#allocation2 + $0x58] sm:$0xff] %v930
        %947 = vst [vmem:[#allocation2 + $0x60] sm:$0xff] %v931
        %948 = vst [vmem:[#allocation2 + $0x68] sm:$0xff] %v932
        %949 = vst [vmem:[#allocation2 + $0x70] sm:$0xff] %v933
        %950 = vst [vmem:[#allocation2 + $0x78] sm:$0xff] %v934
        %p951 = scmp.eq.s32.totalorder %s30, 1
        // Predicated region
        $region57: #{tpu_custom_call.1} parent=39 // pred_check
          %p952 = pneg %p951
        $region58: #{tpu_custom_call.1} parent=39 // pred_check_branch
          %954 = sbr.rel (%p952) target = $region60
        $region59: #{tpu_custom_call.1} parent=39 // pred_region
          %v955 = vld [vmem:[%s277] sm:$0xf]
          %v956 = vld [vmem:[%s277 + $0x4] sm:$0xf]
          %v957 = vld [vmem:[%s277 + $0x8] sm:$0xf]
          %v958 = vld [vmem:[%s277 + $0xc] sm:$0xf]
          %v959 = vld [vmem:[%s277 + $0x10] sm:$0xf]
          %v960 = vld [vmem:[%s277 + $0x14] sm:$0xf]
          %v961 = vld [vmem:[%s277 + $0x18] sm:$0xf]
          %v962 = vld [vmem:[%s277 + $0x1c] sm:$0xf]
          %v963 = vld [vmem:[%s277 + $0x20] sm:$0xf]
          %v964 = vld [vmem:[%s277 + $0x24] sm:$0xf]
          %v965 = vld [vmem:[%s277 + $0x28] sm:$0xf]
          %v966 = vld [vmem:[%s277 + $0x2c] sm:$0xf]
          %v967 = vld [vmem:[%s277 + $0x30] sm:$0xf]
          %v968 = vld [vmem:[%s277 + $0x34] sm:$0xf]
          %v969 = vld [vmem:[%s277 + $0x38] sm:$0xf]
          %v970 = vld [vmem:[%s277 + $0x3c] sm:$0xf]
          %v971 = vunpack.c.l.bf16 %v955
          %v972 = vunpack.c.l.bf16 %v956
          %v973 = vunpack.c.l.bf16 %v957
          %v974 = vunpack.c.l.bf16 %v958
          %v975 = vunpack.c.l.bf16 %v959
          %v976 = vunpack.c.l.bf16 %v960
          %v977 = vunpack.c.l.bf16 %v961
          %v978 = vunpack.c.l.bf16 %v962
          %v979 = vunpack.c.l.bf16 %v963
          %v980 = vunpack.c.l.bf16 %v964
          %v981 = vunpack.c.l.bf16 %v965
          %v982 = vunpack.c.l.bf16 %v966
          %v983 = vunpack.c.l.bf16 %v967
          %v984 = vunpack.c.l.bf16 %v968
          %v985 = vunpack.c.l.bf16 %v969
          %v986 = vunpack.c.l.bf16 %v970
          %v987 = vld [vmem:[#allocation2] sm:$0xff]
          %v988 = vld [vmem:[#allocation2 + $0x8] sm:$0xff]
          %v989 = vld [vmem:[#allocation2 + $0x10] sm:$0xff]
          %v990 = vld [vmem:[#allocation2 + $0x18] sm:$0xff]
          %v991 = vld [vmem:[#allocation2 + $0x20] sm:$0xff]
          %v992 = vld [vmem:[#allocation2 + $0x28] sm:$0xff]
          %v993 = vld [vmem:[#allocation2 + $0x30] sm:$0xff]
          %v994 = vld [vmem:[#allocation2 + $0x38] sm:$0xff]
          %v995 = vld [vmem:[#allocation2 + $0x40] sm:$0xff]
          %v996 = vld [vmem:[#allocation2 + $0x48] sm:$0xff]
          %v997 = vld [vmem:[#allocation2 + $0x50] sm:$0xff]
          %v998 = vld [vmem:[#allocation2 + $0x58] sm:$0xff]
          %v999 = vld [vmem:[#allocation2 + $0x60] sm:$0xff]
          %v1000 = vld [vmem:[#allocation2 + $0x68] sm:$0xff]
          %v1001 = vld [vmem:[#allocation2 + $0x70] sm:$0xff]
          %v1002 = vld [vmem:[#allocation2 + $0x78] sm:$0xff]
          %v1003 = vadd.f32 %v971, %v987
          %v1004 = vadd.f32 %v972, %v988
          %v1005 = vadd.f32 %v973, %v989
          %v1006 = vadd.f32 %v974, %v990
          %v1007 = vadd.f32 %v975, %v991
          %v1008 = vadd.f32 %v976, %v992
          %v1009 = vadd.f32 %v977, %v993
          %v1010 = vadd.f32 %v978, %v994
          %v1011 = vadd.f32 %v979, %v995
          %v1012 = vadd.f32 %v980, %v996
          %v1013 = vadd.f32 %v981, %v997
          %v1014 = vadd.f32 %v982, %v998
          %v1015 = vadd.f32 %v983, %v999
          %v1016 = vadd.f32 %v984, %v1000
          %v1017 = vadd.f32 %v985, %v1001
          %v1018 = vadd.f32 %v986, %v1002
          %1019 = vadd.xlane.f32.xlu0 %v1003
          %v1020 = vpop.xlane.xlu0 %1019
          %1021 = vadd.xlane.f32.xlu0 %v1004
          %v1022 = vpop.xlane.xlu0 %1021
          %1023 = vadd.xlane.f32.xlu0 %v1005
          %v1024 = vpop.xlane.xlu0 %1023
          %1025 = vadd.xlane.f32.xlu0 %v1006
          %v1026 = vpop.xlane.xlu0 %1025
          %1027 = vadd.xlane.f32.xlu0 %v1007
          %v1028 = vpop.xlane.xlu0 %1027
          %1029 = vadd.xlane.f32.xlu0 %v1008
          %v1030 = vpop.xlane.xlu0 %1029
          %1031 = vadd.xlane.f32.xlu0 %v1009
          %v1032 = vpop.xlane.xlu0 %1031
          %1033 = vadd.xlane.f32.xlu0 %v1010
          %v1034 = vpop.xlane.xlu0 %1033
          %1035 = vadd.xlane.f32.xlu0 %v1011
          %v1036 = vpop.xlane.xlu0 %1035
          %1037 = vadd.xlane.f32.xlu0 %v1012
          %v1038 = vpop.xlane.xlu0 %1037
          %1039 = vadd.xlane.f32.xlu0 %v1013
          %v1040 = vpop.xlane.xlu0 %1039
          %1041 = vadd.xlane.f32.xlu0 %v1014
          %v1042 = vpop.xlane.xlu0 %1041
          %1043 = vadd.xlane.f32.xlu0 %v1015
          %v1044 = vpop.xlane.xlu0 %1043
          %1045 = vadd.xlane.f32.xlu0 %v1016
          %v1046 = vpop.xlane.xlu0 %1045
          %1047 = vadd.xlane.f32.xlu0 %v1017
          %v1048 = vpop.xlane.xlu0 %1047
          %1049 = vadd.xlane.f32.xlu0 %v1018
          %v1050 = vpop.xlane.xlu0 %1049
          %v1051 = vrcp.pop 128.0
          %v1052 = vmul.f32 %v1020, %v1051
          %v1053 = vmul.f32 %v1022, %v1051
          %v1054 = vmul.f32 %v1024, %v1051
          %v1055 = vmul.f32 %v1026, %v1051
          %v1056 = vmul.f32 %v1028, %v1051
          %v1057 = vmul.f32 %v1030, %v1051
          %v1058 = vmul.f32 %v1032, %v1051
          %v1059 = vmul.f32 %v1034, %v1051
          %v1060 = vmul.f32 %v1036, %v1051
          %v1061 = vmul.f32 %v1038, %v1051
          %v1062 = vmul.f32 %v1040, %v1051
          %v1063 = vmul.f32 %v1042, %v1051
          %v1064 = vmul.f32 %v1044, %v1051
          %v1065 = vmul.f32 %v1046, %v1051
          %v1066 = vmul.f32 %v1048, %v1051
          %v1067 = vmul.f32 %v1050, %v1051
          %v1068 = vsub.f32 %v1003, %v1052
          %v1069 = vsub.f32 %v1004, %v1053
          %v1070 = vsub.f32 %v1005, %v1054
          %v1071 = vsub.f32 %v1006, %v1055
          %v1072 = vsub.f32 %v1007, %v1056
          %v1073 = vsub.f32 %v1008, %v1057
          %v1074 = vsub.f32 %v1009, %v1058
          %v1075 = vsub.f32 %v1010, %v1059
          %v1076 = vsub.f32 %v1011, %v1060
          %v1077 = vsub.f32 %v1012, %v1061
          %v1078 = vsub.f32 %v1013, %v1062
          %v1079 = vsub.f32 %v1014, %v1063
          %v1080 = vsub.f32 %v1015, %v1064
          %v1081 = vsub.f32 %v1016, %v1065
          %v1082 = vsub.f32 %v1017, %v1066
          %v1083 = vsub.f32 %v1018, %v1067
          %v1084 = vmul.f32 %v1068, %v1068
          %v1085 = vmul.f32 %v1069, %v1069
          %v1086 = vmul.f32 %v1070, %v1070
          %v1087 = vmul.f32 %v1071, %v1071
          %v1088 = vmul.f32 %v1072, %v1072
          %v1089 = vmul.f32 %v1073, %v1073
          %v1090 = vmul.f32 %v1074, %v1074
          %v1091 = vmul.f32 %v1075, %v1075
          %v1092 = vmul.f32 %v1076, %v1076
          %v1093 = vmul.f32 %v1077, %v1077
          %v1094 = vmul.f32 %v1078, %v1078
          %v1095 = vmul.f32 %v1079, %v1079
          %v1096 = vmul.f32 %v1080, %v1080
          %v1097 = vmul.f32 %v1081, %v1081
          %v1098 = vmul.f32 %v1082, %v1082
          %v1099 = vmul.f32 %v1083, %v1083
          %1100 = vadd.xlane.f32.xlu0 %v1084
          %v1101 = vpop.xlane.xlu0 %1100
          %1102 = vadd.xlane.f32.xlu0 %v1085
          %v1103 = vpop.xlane.xlu0 %1102
          %1104 = vadd.xlane.f32.xlu0 %v1086
          %v1105 = vpop.xlane.xlu0 %1104
          %1106 = vadd.xlane.f32.xlu0 %v1087
          %v1107 = vpop.xlane.xlu0 %1106
          %1108 = vadd.xlane.f32.xlu0 %v1088
          %v1109 = vpop.xlane.xlu0 %1108
          %1110 = vadd.xlane.f32.xlu0 %v1089
          %v1111 = vpop.xlane.xlu0 %1110
          %1112 = vadd.xlane.f32.xlu0 %v1090
          %v1113 = vpop.xlane.xlu0 %1112
          %1114 = vadd.xlane.f32.xlu0 %v1091
          %v1115 = vpop.xlane.xlu0 %1114
          %1116 = vadd.xlane.f32.xlu0 %v1092
          %v1117 = vpop.xlane.xlu0 %1116
          %1118 = vadd.xlane.f32.xlu0 %v1093
          %v1119 = vpop.xlane.xlu0 %1118
          %1120 = vadd.xlane.f32.xlu0 %v1094
          %v1121 = vpop.xlane.xlu0 %1120
          %1122 = vadd.xlane.f32.xlu0 %v1095
          %v1123 = vpop.xlane.xlu0 %1122
          %1124 = vadd.xlane.f32.xlu0 %v1096
          %v1125 = vpop.xlane.xlu0 %1124
          %1126 = vadd.xlane.f32.xlu0 %v1097
          %v1127 = vpop.xlane.xlu0 %1126
          %1128 = vadd.xlane.f32.xlu0 %v1098
          %v1129 = vpop.xlane.xlu0 %1128
          %1130 = vadd.xlane.f32.xlu0 %v1099
          %v1131 = vpop.xlane.xlu0 %1130
          %v1132 = vmul.f32 %v1101, %v1051
          %v1133 = vmul.f32 %v1103, %v1051
          %v1134 = vmul.f32 %v1105, %v1051
          %v1135 = vmul.f32 %v1107, %v1051
          %v1136 = vmul.f32 %v1109, %v1051
          %v1137 = vmul.f32 %v1111, %v1051
          %v1138 = vmul.f32 %v1113, %v1051
          %v1139 = vmul.f32 %v1115, %v1051
          %v1140 = vmul.f32 %v1117, %v1051
          %v1141 = vmul.f32 %v1119, %v1051
          %v1142 = vmul.f32 %v1121, %v1051
          %v1143 = vmul.f32 %v1123, %v1051
          %v1144 = vmul.f32 %v1125, %v1051
          %v1145 = vmul.f32 %v1127, %v1051
          %v1146 = vmul.f32 %v1129, %v1051
          %v1147 = vmul.f32 %v1131, %v1051
          %v1148 = vadd.f32 %v1132, 1e-05
          %v1149 = vadd.f32 %v1133, 1e-05
          %v1150 = vadd.f32 %v1134, 1e-05
          %v1151 = vadd.f32 %v1135, 1e-05
          %v1152 = vadd.f32 %v1136, 1e-05
          %v1153 = vadd.f32 %v1137, 1e-05
          %v1154 = vadd.f32 %v1138, 1e-05
          %v1155 = vadd.f32 %v1139, 1e-05
          %v1156 = vadd.f32 %v1140, 1e-05
          %v1157 = vadd.f32 %v1141, 1e-05
          %v1158 = vadd.f32 %v1142, 1e-05
          %v1159 = vadd.f32 %v1143, 1e-05
          %v1160 = vadd.f32 %v1144, 1e-05
          %v1161 = vadd.f32 %v1145, 1e-05
          %v1162 = vadd.f32 %v1146, 1e-05
          %v1163 = vadd.f32 %v1147, 1e-05
          %v1164 = vrsqrt.pop %v1148
          %v1165 = vrsqrt.pop %v1149
          %v1166 = vrsqrt.pop %v1150
          %v1167 = vrsqrt.pop %v1151
          %v1168 = vrsqrt.pop %v1152
          %v1169 = vrsqrt.pop %v1153
          %v1170 = vrsqrt.pop %v1154
          %v1171 = vrsqrt.pop %v1155
          %v1172 = vrsqrt.pop %v1156
          %v1173 = vrsqrt.pop %v1157
          %v1174 = vrsqrt.pop %v1158
          %v1175 = vrsqrt.pop %v1159
          %v1176 = vrsqrt.pop %v1160
          %v1177 = vrsqrt.pop %v1161
          %v1178 = vrsqrt.pop %v1162
          %v1179 = vrsqrt.pop %v1163
          %v1180 = vmul.f32 %v1068, %v1164
          %v1181 = vmul.f32 %v1069, %v1165
          %v1182 = vmul.f32 %v1070, %v1166
          %v1183 = vmul.f32 %v1071, %v1167
          %v1184 = vmul.f32 %v1072, %v1168
          %v1185 = vmul.f32 %v1073, %v1169
          %v1186 = vmul.f32 %v1074, %v1170
          %v1187 = vmul.f32 %v1075, %v1171
          %v1188 = vmul.f32 %v1076, %v1172
          %v1189 = vmul.f32 %v1077, %v1173
          %v1190 = vmul.f32 %v1078, %v1174
          %v1191 = vmul.f32 %v1079, %v1175
          %v1192 = vmul.f32 %v1080, %v1176
          %v1193 = vmul.f32 %v1081, %v1177
          %v1194 = vmul.f32 %v1082, %v1178
          %v1195 = vmul.f32 %v1083, %v1179
          %v1196 = vld [vmem:[%s3] sm:$0x1]
          %v1198 = vlaneseq
          %v1199 = vshrl.u32 %v1198, 7
          %v1200 = vsub.s32 0, %v1199
          %v1201 = vrot.slane %v1196, %v1200
          %v1203 = vmul.f32 %v1180, %v1201
          %v1204 = vmul.f32 %v1181, %v1201
          %v1205 = vmul.f32 %v1182, %v1201
          %v1206 = vmul.f32 %v1183, %v1201
          %v1207 = vmul.f32 %v1184, %v1201
          %v1208 = vmul.f32 %v1185, %v1201
          %v1209 = vmul.f32 %v1186, %v1201
          %v1210 = vmul.f32 %v1187, %v1201
          %v1211 = vmul.f32 %v1188, %v1201
          %v1212 = vmul.f32 %v1189, %v1201
          %v1213 = vmul.f32 %v1190, %v1201
          %v1214 = vmul.f32 %v1191, %v1201
          %v1215 = vmul.f32 %v1192, %v1201
          %v1216 = vmul.f32 %v1193, %v1201
          %v1217 = vmul.f32 %v1194, %v1201
          %v1218 = vmul.f32 %v1195, %v1201
          %v1219 = vld [vmem:[%s4] sm:$0x1]
          %v1221 = vlaneseq
          %v1222 = vshrl.u32 %v1221, 7
          %v1223 = vsub.s32 0, %v1222
          %v1224 = vrot.slane %v1219, %v1223
          %v1226 = vadd.f32 %v1203, %v1224
          %v1227 = vadd.f32 %v1204, %v1224
          %v1228 = vadd.f32 %v1205, %v1224
          %v1229 = vadd.f32 %v1206, %v1224
          %v1230 = vadd.f32 %v1207, %v1224
          %v1231 = vadd.f32 %v1208, %v1224
          %v1232 = vadd.f32 %v1209, %v1224
          %v1233 = vadd.f32 %v1210, %v1224
          %v1234 = vadd.f32 %v1211, %v1224
          %v1235 = vadd.f32 %v1212, %v1224
          %v1236 = vadd.f32 %v1213, %v1224
          %v1237 = vadd.f32 %v1214, %v1224
          %v1238 = vadd.f32 %v1215, %v1224
          %v1239 = vadd.f32 %v1216, %v1224
          %v1240 = vadd.f32 %v1217, %v1224
          %v1241 = vadd.f32 %v1218, %v1224
          %1242 = vst [vmem:[%s331] sm:$0xff] %v1226
          %1243 = vst [vmem:[%s331 + $0x8] sm:$0xff] %v1227
          %1244 = vst [vmem:[%s331 + $0x10] sm:$0xff] %v1228
          %1245 = vst [vmem:[%s331 + $0x18] sm:$0xff] %v1229
          %1246 = vst [vmem:[%s331 + $0x20] sm:$0xff] %v1230
          %1247 = vst [vmem:[%s331 + $0x28] sm:$0xff] %v1231
          %1248 = vst [vmem:[%s331 + $0x30] sm:$0xff] %v1232
          %1249 = vst [vmem:[%s331 + $0x38] sm:$0xff] %v1233
          %1250 = vst [vmem:[%s331 + $0x40] sm:$0xff] %v1234
          %1251 = vst [vmem:[%s331 + $0x48] sm:$0xff] %v1235
          %1252 = vst [vmem:[%s331 + $0x50] sm:$0xff] %v1236
          %1253 = vst [vmem:[%s331 + $0x58] sm:$0xff] %v1237
          %1254 = vst [vmem:[%s331 + $0x60] sm:$0xff] %v1238
          %1255 = vst [vmem:[%s331 + $0x68] sm:$0xff] %v1239
          %1256 = vst [vmem:[%s331 + $0x70] sm:$0xff] %v1240
          %1257 = vst [vmem:[%s331 + $0x78] sm:$0xff] %v1241
        $region60: #{tpu_custom_call.1} parent=39 // pred_fallthru
          _
        %s1258 = sand.u32 %s165, 1
        %s1259 = scalar_lea.sflag [#allocation5], %s1258
        %s1260 = sand.u32 %s165, 1
        %s1261 = smul.addr %s1260, 128
        %s1262 = scalar_lea.vmem [#allocation9], %s1261
        // Predicated region
        $region61: #{tpu_custom_call.1} parent=39 // pred_check
          %p1263 = pneg %p175
        $region62: #{tpu_custom_call.1} parent=39 // pred_check_branch
          %1265 = sbr.rel (%p1263) target = $region64
        $region63: #{tpu_custom_call.1} parent=39 // pred_region
          %s1266 = smul.u32 16, %s29
          %s1268 = ssub.s32 2048, 2048
          %1269 = vsyncadd %s1259, %s1268
          %s1270 = smul.addr %s1266, 128
          %s1271 = scalar_lea.hbm %s5, %s1270
          %s1272 = sshll.u32 %s1262, 4
          %s1273 = int_to_ptr.vmem [resolvable:$true] %s1272
          %1278 = dma.vmem_to_hbm [thread:$0]  %s1273, 2048, %s1271, %s1259, 128, 128, 8
        $region64: #{tpu_custom_call.1} parent=39 // pred_fallthru
          _
      $region40: #{tpu_custom_call.1} parent=5 // pred_fallthru
        _
      %p1279 = scmp.le.s32.totalorder 2, %s20
      // Predicated region
      $region65: #{tpu_custom_call.1} parent=5 // pred_check
        %p1280 = pneg %p1279
      $region66: #{tpu_custom_call.1} parent=5 // pred_check_branch
        %1282 = sbr.rel (%p1280) target = $region68
      $region67: #{tpu_custom_call.1} parent=5 // pred_region
        %s1283 = ssub.s32 %s20, 2
        // Predicated region
        $region69: #{tpu_custom_call.1} parent=67 // pred_check
          %p1284 = pneg %p181
        $region70: #{tpu_custom_call.1} parent=67 // pred_check_branch
          %1286 = sbr.rel (%p1284) target = $region72
        $region71: #{tpu_custom_call.1} parent=67 // pred_region
          %s1287 = sand.u32 %s166, 1
          %s1288 = scalar_lea.sflag [#allocation5], %s1287
          %s1289 = sand.u32 %s166, 1
          %s1290 = smul.addr %s1289, 128
          %s1291 = scalar_lea.vmem [#allocation9], %s1290
          %1292 = dma.done %s1288, 2048
        $region72: #{tpu_custom_call.1} parent=67 // pred_fallthru
          _
      $region68: #{tpu_custom_call.1} parent=5 // pred_fallthru
        _
    $region6: #{tpu_custom_call.1} parent=1 // loop_footer
      %s24 = sadd.s32 1, %s20
    $region7: #{tpu_custom_call.1} parent=1 // loop_footer_branch
      %19 = sbr.rel target = $region3
    $region8: #{tpu_custom_call.1} parent=1 // loop_exit
      _
    %1293 = vsyncpa [#allocation4], 1
    %s1294 = scalar_lea.sflag [#allocation4], 1
    %1295 = vsyncpa %s1294, 1
    %1296 = vsyncpa [#allocation7], 1
    %s1297 = scalar_lea.sflag [#allocation7], 1
    %1298 = vsyncpa %s1297, 1
    %1299 = vsyncpa [#allocation5], 1
    %s1300 = scalar_lea.sflag [#allocation5], 1
    %1301 = vsyncpa %s1300, 1

</llo_original>
